<compile_context>
chip_gen: v6e
topology: v6e:2x2x1
jax: 0.10.0
libtpu: 0.0.40
codegen_flags: <defaults>
</compile_context>

<pallas_src>
import functools

import jax
import jax.numpy as jnp
from jax.experimental import pallas as pl
from jax.experimental.pallas import tpu as pltpu

OPENAI_CLIP_MEAN = (0.48145466, 0.4578275, 0.40821073)
OPENAI_CLIP_STD = (0.26862954, 0.26130258, 0.27577711)

PATCH = 4                       # patch size of the miniature vision tower
HIDDEN = 128                    # hidden width (lane-dense / MXU friendly)
NUM_LEVELS = 5                  # "excellent", "good", "fair", "poor", "bad"
DIN = 3 * PATCH * PATCH         # 48 raw patch features (streamed un-padded)
NUM_SPLITS = 2                  # leading "parallel" axis: 2 TCs on v7x
MAX_TILE_P = 512                # patch rows per grid step (VMEM-safe everywhere)
RATE_WEIGHTS = (5.0, 4.0, 3.0, 2.0, 1.0)


# ---------------------------------------------------------------------------
# Pallas kernel: patch-embed matmul (bf16 MXU, f32 acc) + GELU + per-split
# pooled partial sums.  CLIP normalization is pre-folded into we/be.
# ---------------------------------------------------------------------------
def _embed_pool_kernel(p_ref, we_ref, be_ref, o_ref, *, tile_p):
    step = pl.program_id(1)

    @pl.when(step == 0)
    def _():
        o_ref[...] = jnp.zeros_like(o_ref)

    # patch embedding: bf16 MXU matmul at raw K=48, f32 accumulate
    h = jnp.dot(p_ref[...], we_ref[...], preferred_element_type=jnp.float32)
    h = h + be_ref[...]
    # TODO(synk): the wrapped CLIP-style tower uses quick_gelu; tanh-GELU here.
    h = jax.nn.gelu(h, approximate=True)

    # per-sublane partial sums (VPU vreg adds); the single cross-sublane
    # reduce happens once on the tiny (NUM_SPLITS*8, HIDDEN) output in JAX.
    o_ref[...] += jnp.sum(h.reshape(tile_p // 8, 8, HIDDEN), axis=0)


def qalign_pooled_partials(patches_padded, w_embed_folded, b_embed_folded, *,
                           tile_p, n_inner):
    p_pad, din = patches_padded.shape
    assert p_pad == NUM_SPLITS * n_inner * tile_p
    kernel = functools.partial(_embed_pool_kernel, tile_p=tile_p)
    return pl.pallas_call(
        kernel,
        out_shape=jax.ShapeDtypeStruct((NUM_SPLITS * 8, HIDDEN), jnp.float32),
        grid_spec=pltpu.PrefetchScalarGridSpec(
            num_scalar_prefetch=0,
            grid=(NUM_SPLITS, n_inner),
            in_specs=[
                # patches: only streaming operand, raw K=48 (block last dim ==
                # full array dim)
                pl.BlockSpec((tile_p, din), lambda c, i: (c * n_inner + i, 0)),
                pl.BlockSpec((din, HIDDEN), lambda c, i: (0, 0)),   # w_embed (folded)
                pl.BlockSpec((1, HIDDEN), lambda c, i: (0, 0)),     # b_embed (folded)
            ],
            # per-split partial pool accumulator lives in the output block
            out_specs=pl.BlockSpec((8, HIDDEN), lambda c, i: (c, 0)),
        ),
        compiler_params=pltpu.CompilerParams(
            dimension_semantics=("parallel", "arbitrary"),
            vmem_limit_bytes=32 * 1024 * 1024,
        ),
    )(patches_padded, w_embed_folded, b_embed_folded)


# ---------------------------------------------------------------------------
# Glue (plain JAX, fused under one jit): expand2square + im2col + pad + head
# ---------------------------------------------------------------------------
def expand2square(img_chw):
    """Pad to square with OPENAI_CLIP_MEAN background (PIL-style uint8 quantized)."""
    C, H, W = img_chw.shape
    maxwh = int(pl.cdiv(max(H, W), PATCH) * PATCH)   # keep divisible by PATCH
    bg = jnp.asarray([int(v * 255) / 255.0 for v in OPENAI_CLIP_MEAN],
                     jnp.float32).reshape(C, 1, 1).astype(jnp.bfloat16)
    canvas = jnp.broadcast_to(bg, (C, maxwh, maxwh))
    top = (maxwh - H) // 2
    left = (maxwh - W) // 2
    # bf16 before the im2col transpose: halves the wrapper-side HBM traffic
    return jax.lax.dynamic_update_slice(canvas, img_chw.astype(jnp.bfloat16),
                                        (0, top, left))


def extract_patches(img_chw, patch):
    C, H, W = img_chw.shape
    hp, wp = H // patch, W // patch
    x = img_chw.reshape(C, hp, patch, wp, patch)
    x = jnp.transpose(x, (1, 3, 0, 2, 4))             # (hp, wp, C, ph, pw)
    return x.reshape(hp * wp, C * patch * patch)       # (P, DIN) bf16


def _choose_tiling(p_true):
    per_split = pl.cdiv(p_true, NUM_SPLITS)
    tile_p = min(MAX_TILE_P, max(16, pl.cdiv(per_split, 16) * 16))
    n_inner = pl.cdiv(per_split, tile_p)
    p_pad = NUM_SPLITS * n_inner * tile_p
    return tile_p, n_inner, p_pad


def init_params(key):
    k1, k2, k3, k4 = jax.random.split(key, 4)
    w_embed = jax.random.normal(k1, (DIN, HIDDEN), jnp.float32) / jnp.sqrt(DIN)
    b_embed = jax.random.normal(k2, (1, HIDDEN), jnp.float32) * 0.01
    w_head = jax.random.normal(k3, (HIDDEN, NUM_LEVELS), jnp.float32) / jnp.sqrt(HIDDEN)
    b_head = jax.random.normal(k4, (NUM_LEVELS,), jnp.float32) * 0.01

    # ---- fold CLIP (x - mean)/std into the patch-embed affine ----
    ch = jnp.arange(DIN) // (PATCH * PATCH)            # channel of each feature
    mean = jnp.asarray(OPENAI_CLIP_MEAN, jnp.float32)[ch]
    std = jnp.asarray(OPENAI_CLIP_STD, jnp.float32)[ch]
    w_fold = w_embed / std[:, None]
    b_fold = b_embed - (mean / std)[None, :] @ w_embed          # (1, HIDDEN) f32

    return dict(
        w_embed_folded=w_fold.astype(jnp.bfloat16),    # (DIN, HIDDEN) bf16
        b_embed_folded=b_fold,                          # (1, HIDDEN) f32
        w_head=w_head,                                  # (HIDDEN, NUM_LEVELS)
        b_head=b_head,                                  # (NUM_LEVELS,)
    )


@jax.jit
def _qalign_forward_jit(x, params):
    img = expand2square(x[0])                          # (C, S, S) bf16, mean bg
    patches = extract_patches(img, PATCH)              # (P, DIN) bf16
    p_true = patches.shape[0]
    tile_p, n_inner, p_pad = _choose_tiling(p_true)
    patches_padded = jnp.pad(patches, ((0, p_pad - p_true), (0, 0)))

    partials = qalign_pooled_partials(
        patches_padded, params["w_embed_folded"], params["b_embed_folded"],
        tile_p=tile_p, n_inner=n_inner)                # (NUM_SPLITS*8, HIDDEN) f32

    # combine splits + sublanes once; zero pad rows contribute exactly gelu(b)
    pooled_sum = jnp.sum(partials, axis=0)             # (HIDDEN,)
    pad_term = jax.nn.gelu(params["b_embed_folded"][0], approximate=True)
    pooled = (pooled_sum - (p_pad - p_true) * pad_term) / p_true

    # rating head: 5 logits, exact softmax, weighted sum with [5,4,3,2,1]
    logits = pooled @ params["w_head"] + params["b_head"]
    probs = jax.nn.softmax(logits)
    score = jnp.sum(probs * jnp.asarray(RATE_WEIGHTS, jnp.float32))
    return score.reshape(1)


def qalign_forward(x, params, task_='quality', input_='image'):
    """x: (1, C, H, W) float32 in [0, 1] (NCHW, batch must be 1)."""
    if input_ != 'image':
        raise NotImplementedError(f'Input type {input_} is not supported yet.')
    assert x.shape[0] == 1, 'Currently, only support batch size 1.'
    return _qalign_forward_jit(x, params)


if __name__ == "__main__":
    key = jax.random.PRNGKey(0)
    k_img, k_par = jax.random.split(key)

    # NCHW input, batch=1 (the module asserts batch size 1); non-square so the
    # expand2square padding path is exercised; large enough that the grid has
    # both core splits, multiple inner tiles, and padded patch rows.
    x = jax.random.uniform(k_img, (1, 3, 160, 128), jnp.float32)

    params = init_params(k_par)

    score = qalign_forward(x, params, task_='quality', input_='image')
    score = jax.block_until_ready(score)

    s = float(score[0])
    assert score.shape == (1,)
    # softmax-weighted mean of [5,4,3,2,1] must land in the rating range
    assert 0.99 <= s <= 5.01, f"score {s} outside rating range [1, 5]"
    print("KERNEL_OK")
</pallas_src>

<mosaic_0001>
module attributes {stable_mosaic.version = 11 : i64} {
  func.func @_embed_pool_kernel(%arg0: i32, %arg1: i32, %arg2: memref<512x48xbf16, #tpu.memory_space<vmem>>, %arg3: memref<48x128xbf16, #tpu.memory_space<vmem>>, %arg4: memref<1x128xf32, #tpu.memory_space<vmem>>, %arg5: memref<8x128xf32, #tpu.memory_space<vmem>>) attributes {dimension_semantics = [#tpu.dimension_semantics<parallel>, #tpu.dimension_semantics<arbitrary>], iteration_bounds = array<i64: 2, 2>, scalar_prefetch = 0 : i64, scratch_operands = 0 : i64, tpu.core_type = #tpu.core_type<tc>, window_params = [{transform_indices = @transform_0, window_bounds = array<i64: 512, 48>}, {pipeline_mode = #tpu.pipeline_mode<synchronous>, transform_indices = @transform_1, window_bounds = array<i64: 48, 128>}, {pipeline_mode = #tpu.pipeline_mode<synchronous>, transform_indices = @transform_2, window_bounds = array<i64: 1, 128>}, {transform_indices = @transform_3, window_bounds = array<i64: 8, 128>}]} {
    %c0_i32 = arith.constant 0 : i32
    %0 = arith.cmpi eq, %arg1, %c0_i32 : i32
    %1 = arith.extui %0 : i1 to i32
    %c0_i32_0 = arith.constant 0 : i32
    %2 = arith.cmpi ne, %1, %c0_i32_0 : i32
    scf.if %2 {
      %cst_15 = arith.constant 0.000000e+00 : f32
      %27 = vector.broadcast %cst_15 : f32 to vector<8x128xf32>
      %c0_16 = arith.constant 0 : index
      %c0_17 = arith.constant 0 : index
      %28 = vector.load %arg5[%c0_16, %c0_17] : memref<8x128xf32, #tpu.memory_space<vmem>>, vector<8x128xf32>
      tpu.vector_store %arg5[%c0_16, %c0_17], %27 {strides = array<i32>} : memref<8x128xf32, #tpu.memory_space<vmem>>, vector<8x128xf32>,
    } else {
    }
    %c0 = arith.constant 0 : index
    %c0_1 = arith.constant 0 : index
    %3 = vector.load %arg2[%c0, %c0_1] : memref<512x48xbf16, #tpu.memory_space<vmem>>, vector<512x48xbf16>
    %c0_2 = arith.constant 0 : index
    %c0_3 = arith.constant 0 : index
    %4 = vector.load %arg3[%c0_2, %c0_3] : memref<48x128xbf16, #tpu.memory_space<vmem>>, vector<48x128xbf16>
    %cst = arith.constant dense<0.000000e+00> : vector<512x128xf32>
    %5 = tpu.matmul %3, %4, %cst {dimension_numbers = #tpu.dot_dimension_numbers<[1], [0], [0], [1], [0, 0, 1, 1], [], []>} : vector<512x48xbf16>, vector<48x128xbf16>, vector<512x128xf32> -> vector<512x128xf32>
    %c0_4 = arith.constant 0 : index
    %c0_5 = arith.constant 0 : index
    %6 = vector.load %arg4[%c0_4, %c0_5] : memref<1x128xf32, #tpu.memory_space<vmem>>, vector<1x128xf32>
    %7 = vector.broadcast %6 : vector<1x128xf32> to vector<512x128xf32>
    %8 = arith.addf %5, %7 : vector<512x128xf32>
    %9 = arith.mulf %8, %8 : vector<512x128xf32>
    %10 = arith.mulf %8, %9 : vector<512x128xf32>
    %cst_6 = arith.constant 4.471500e-02 : f32
    %11 = vector.broadcast %cst_6 : f32 to vector<512x128xf32>
    %12 = arith.mulf %11, %10 : vector<512x128xf32>
    %13 = arith.addf %8, %12 : vector<512x128xf32>
    %cst_7 = arith.constant 0.797884583 : f32
    %14 = vector.broadcast %cst_7 : f32 to vector<512x128xf32>
    %15 = arith.mulf %14, %13 : vector<512x128xf32>
    %16 = math.tanh %15 : vector<512x128xf32>
    %cst_8 = arith.constant 1.000000e+00 : f32
    %17 = vector.broadcast %cst_8 : f32 to vector<512x128xf32>
    %18 = arith.addf %17, %16 : vector<512x128xf32>
    %cst_9 = arith.constant 5.000000e-01 : f32
    %19 = vector.broadcast %cst_9 : f32 to vector<512x128xf32>
    %20 = arith.mulf %19, %18 : vector<512x128xf32>
    %21 = arith.mulf %8, %20 : vector<512x128xf32>
    %c0_10 = arith.constant 0 : index
    %c0_11 = arith.constant 0 : index
    %22 = vector.load %arg5[%c0_10, %c0_11] : memref<8x128xf32, #tpu.memory_space<vmem>>, vector<8x128xf32>
    %23 = vector.shape_cast %21 : vector<512x128xf32> to vector<64x8x128xf32>
    %cst_12 = arith.constant dense<0.000000e+00> : vector<8x128xf32>
    %24 = vector.multi_reduction <add>, %23, %cst_12 [0] : vector<64x8x128xf32> to vector<8x128xf32>
    %25 = arith.addf %22, %24 : vector<8x128xf32>
    %c0_13 = arith.constant 0 : index
    %c0_14 = arith.constant 0 : index
    %26 = vector.load %arg5[%c0_13, %c0_14] : memref<8x128xf32, #tpu.memory_space<vmem>>, vector<8x128xf32>
    tpu.vector_store %arg5[%c0_13, %c0_14], %25 {strides = array<i32>} : memref<8x128xf32, #tpu.memory_space<vmem>>, vector<8x128xf32>,
    return
  }
  func.func @transform_0(%arg0: i32, %arg1: i32) -> (i32, i32) {
    %c2_i32 = arith.constant 2 : i32
    %0 = arith.muli %arg0, %c2_i32 : i32
    %1 = arith.addi %0, %arg1 : i32
    %c0_i32 = arith.constant 0 : i32
    %c0_i32_0 = arith.constant 0 : i32
    return %1, %c0_i32 : i32, i32
  }
  func.func @transform_1(%arg0: i32, %arg1: i32) -> (i32, i32) {
    %c0_i32 = arith.constant 0 : i32
    %c0_i32_0 = arith.constant 0 : i32
    %c0_i32_1 = arith.constant 0 : i32
    return %c0_i32, %c0_i32_0 : i32, i32
  }
  func.func @transform_2(%arg0: i32, %arg1: i32) -> (i32, i32) {
    %c0_i32 = arith.constant 0 : i32
    %c0_i32_0 = arith.constant 0 : i32
    %c0_i32_1 = arith.constant 0 : i32
    return %c0_i32, %c0_i32_0 : i32, i32
  }
  func.func @transform_3(%arg0: i32, %arg1: i32) -> (i32, i32) {
    %c0_i32 = arith.constant 0 : i32
    %c0_i32_0 = arith.constant 0 : i32
    return %arg0, %c0_i32 : i32, i32
  }
}

</mosaic_0001>

<llo_original>
// kernel: _qalign_forward_jit.1
$region0: #{_qalign_forward_jit.1}
  #allocation0 [shape = 'u32[]', space=smem, size = 0x4, offset = 0x4, fixed_abs, tag = 'smem constant byte address 0x4 - core index']
  #allocation1 [shape = 'u32[144,128]{1,0:T(1,128)}', space=vmem, size = 0x12000, scoped, tag = 'internal scratch']
  %s0 = inlined_call_operand.vmem [shape: bf16[2048,48], index: 0, kind: input, shape index: {}]
  %s1 = inlined_call_operand.vmem [shape: bf16[48,128], index: 1, kind: input, shape index: {}]
  %s2 = inlined_call_operand.vmem [shape: f32[1,128], index: 2, kind: input, shape index: {}]
  %s3 = inlined_call_operand.vmem [shape: f32[16,128], index: 3, kind: output, shape index: {}]
  %s4 = sld [smem:[#allocation0]]
  $region49: #{_qalign_forward_jit.1} parent=0
    _
  %s6 = ssub.s32 1, %s4
  %s7 = scalar_select 0, %s6, %s4
  loop: start=0, step=1, limit=6
  $region2: #{_qalign_forward_jit.1} parent=0 // loop_pre_header
    _
  $region3: #{_qalign_forward_jit.1} parent=0 // loop_header
    %s9 = sphi 0, %s13
    %p10 = scmp.ge.s32.totalorder %s9, 6
    %s16 = sphi 0, %s28
    %s17 = sphi 0, %s24
    %s18 = sphi 0, %s16
    %s19 = sphi 0, %s17
    %s20 = sphi 0, %s18
    %s21 = sphi 0, %s19
    %s35 = sphi 0, %s37
    %s38 = sphi 0, %s35
    %s39 = sphi 0, %s38
    %s55 = sphi 0, %s39
    %s59 = sphi 0, %s59
    %s61 = sphi 0, %s59
    %s62 = sphi 0, %s61
    %s76 = sphi 0, %s62
    %s80 = sphi 0, %s80
    %s82 = sphi 0, %s80
    %s83 = sphi 0, %s82
    %s97 = sphi 0, %s83
    %s103 = sphi 0, %s105
    %s106 = sphi 0, %s103
    %s107 = sphi 0, %s106
    %s123 = sphi 0, %s107
  $region4: #{_qalign_forward_jit.1} parent=0 // loop_header_branch
    %12 = sbr.rel (%p10) target = $region8
  $region5: #{_qalign_forward_jit.1} parent=0 // loop_body
    %s14 = ssub.s32 %s9, 1
    %s15 = ssub.s32 %s9, 2
    %s22 = sadd.s32 1, %s17
    %p23 = scmp.ge.s32.totalorder %s22, 2
    %s24 = scalar_select %p23, 0, %s22
    %s25 = sadd.s32 1, %s16
    %s26 = scalar_select %p23, %s25, %s16
    %p27 = scmp.ge.s32.totalorder %s26, 2
    %s28 = scalar_select %p27, 0, %s26
    %s29 = smul.u32 %s16, 2
    %s30 = sadd.s32 %s29, %s17
    %s31 = smul.u32 %s28, 2
    %s32 = sadd.s32 %s31, %s24
    %s33 = ssub.s32 %s30, %s32
    %p34 = scmp.eq.s32.totalorder %s33, 0
    %s36 = sadd.s32 %s35, 1
    %s37 = scalar_select %p34, %s35, %s36
    %p40 = pneg %p34
    %p41 = scmp.eq.s32.totalorder %s9, 3
    %p42 = por %p40, %p41
    %p43 = scmp.ne.s32.totalorder %s35, %s38
    %p44 = scmp.eq.s32.totalorder %s9, 0
    %p45 = por %p43, %p44
    %p46 = scmp.ne.s32.totalorder %s35, %s38
    %p47 = scmp.eq.s32.totalorder %s14, 3
    %p48 = por %p46, %p47
    %p49 = scmp.ne.s32.totalorder %s38, %s39
    %p50 = scmp.eq.s32.totalorder %s14, 0
    %p51 = por %p49, %p50
    %p52 = scmp.ne.s32.totalorder %s38, %s39
    %p53 = scmp.eq.s32.totalorder %s15, 3
    %p54 = por %p52, %p53
    %p56 = scmp.ne.s32.totalorder %s39, %s55
    %p57 = scmp.eq.s32.totalorder %s15, 0
    %p58 = por %p56, %p57
    %s60 = sadd.s32 %s59, 1
    %p63 = scmp.eq.s32.totalorder %s9, 3
    %p64 = scmp.ne.s32.totalorder %s59, %s61
    %p65 = scmp.eq.s32.totalorder %s9, 0
    %p66 = por %p64, %p65
    %p67 = scmp.ne.s32.totalorder %s59, %s61
    %p68 = scmp.eq.s32.totalorder %s14, 3
    %p69 = por %p67, %p68
    %p70 = scmp.ne.s32.totalorder %s61, %s62
    %p71 = scmp.eq.s32.totalorder %s14, 0
    %p72 = por %p70, %p71
    %p73 = scmp.ne.s32.totalorder %s61, %s62
    %p74 = scmp.eq.s32.totalorder %s15, 3
    %p75 = por %p73, %p74
    %p77 = scmp.ne.s32.totalorder %s62, %s76
    %p78 = scmp.eq.s32.totalorder %s15, 0
    %p79 = por %p77, %p78
    %s81 = sadd.s32 %s80, 1
    %p84 = scmp.eq.s32.totalorder %s9, 3
    %p85 = scmp.ne.s32.totalorder %s80, %s82
    %p86 = scmp.eq.s32.totalorder %s9, 0
    %p87 = por %p85, %p86
    %p88 = scmp.ne.s32.totalorder %s80, %s82
    %p89 = scmp.eq.s32.totalorder %s14, 3
    %p90 = por %p88, %p89
    %p91 = scmp.ne.s32.totalorder %s82, %s83
    %p92 = scmp.eq.s32.totalorder %s14, 0
    %p93 = por %p91, %p92
    %p94 = scmp.ne.s32.totalorder %s82, %s83
    %p95 = scmp.eq.s32.totalorder %s15, 3
    %p96 = por %p94, %p95
    %p98 = scmp.ne.s32.totalorder %s83, %s97
    %p99 = scmp.eq.s32.totalorder %s15, 0
    %p100 = por %p98, %p99
    %s101 = ssub.s32 %s16, %s28
    %p102 = scmp.eq.s32.totalorder %s101, 0
    %s104 = sadd.s32 %s103, 1
    %s105 = scalar_select %p102, %s103, %s104
    %p108 = pneg %p102
    %p109 = scmp.eq.s32.totalorder %s9, 3
    %p110 = por %p108, %p109
    %p111 = scmp.ne.s32.totalorder %s103, %s106
    %p112 = scmp.eq.s32.totalorder %s9, 0
    %p113 = por %p111, %p112
    %p114 = scmp.ne.s32.totalorder %s103, %s106
    %p115 = scmp.eq.s32.totalorder %s14, 3
    %p116 = por %p114, %p115
    %p117 = scmp.ne.s32.totalorder %s106, %s107
    %p118 = scmp.eq.s32.totalorder %s14, 0
    %p119 = por %p117, %p118
    %p120 = scmp.ne.s32.totalorder %s106, %s107
    %p121 = scmp.eq.s32.totalorder %s15, 3
    %p122 = por %p120, %p121
    %p124 = scmp.ne.s32.totalorder %s107, %s123
    %p125 = scmp.eq.s32.totalorder %s15, 0
    %p126 = por %p124, %p125
    %p127 = scmp.le.s32.totalorder 1, %s9
    %p128 = scmp.lt.s32.totalorder %s9, 5
    %p129 = pnand %p127, %p128
    %p130 = pneg %p129
    // Predicated region
    $region9: #{_qalign_forward_jit.1} parent=5 // pred_check
      _
    $region10: #{_qalign_forward_jit.1} parent=5 // pred_check_branch
      %132 = sbr.rel (%p129) target = $region12
    $region11: #{_qalign_forward_jit.1} parent=5 // pred_region
      %s133 = ssub.s32 %s9, 1
      // Predicated region
      $region13: #{_qalign_forward_jit.1} parent=11 // pred_check
        %p134 = pneg %p72
      $region14: #{_qalign_forward_jit.1} parent=11 // pred_check_branch
        %136 = sbr.rel (%p134) target = $region16
      $region15: #{_qalign_forward_jit.1} parent=11 // pred_region
        _
      $region16: #{_qalign_forward_jit.1} parent=11 // pred_fallthru
        _
      // Predicated region
      $region17: #{_qalign_forward_jit.1} parent=11 // pred_check
        %p137 = pneg %p93
      $region18: #{_qalign_forward_jit.1} parent=11 // pred_check_branch
        %139 = sbr.rel (%p137) target = $region20
      $region19: #{_qalign_forward_jit.1} parent=11 // pred_region
        _
      $region20: #{_qalign_forward_jit.1} parent=11 // pred_fallthru
        _
    $region12: #{_qalign_forward_jit.1} parent=5 // pred_fallthru
      _
    %p140 = scmp.lt.s32.totalorder %s9, 4
    // Predicated region
    $region21: #{_qalign_forward_jit.1} parent=5 // pred_check
      %p141 = pneg %p140
    $region22: #{_qalign_forward_jit.1} parent=5 // pred_check_branch
      %143 = sbr.rel (%p141) target = $region24
    $region23: #{_qalign_forward_jit.1} parent=5 // pred_region
      // Predicated region
      $region25: #{_qalign_forward_jit.1} parent=23 // pred_check
        %p144 = pneg %p45
      $region26: #{_qalign_forward_jit.1} parent=23 // pred_check_branch
        %146 = sbr.rel (%p144) target = $region28
      $region27: #{_qalign_forward_jit.1} parent=23 // pred_region
        %s147 = smul.u32 %s16, 2
        %s148 = sadd.s32 %s147, %s17
        %s149 = smul.u32 64, %s148
        %p150 = scmp.lt.s32.totalorder %s149, 255
        %s151 = scalar_select %p150, %s149, 255
        %s152 = smul.addr %s151, 4
        %s153 = scalar_lea.vmem %s0, %s152
        %s154 = smul.u32 %s16, 2
        %s155 = sadd.s32 %s154, %s17
        %s156 = smul.u32 64, %s155
      $region28: #{_qalign_forward_jit.1} parent=23 // pred_fallthru
        _
    $region24: #{_qalign_forward_jit.1} parent=5 // pred_fallthru
      _
    %p157 = scmp.le.s32.totalorder 1, %s9
    %p158 = scmp.lt.s32.totalorder %s9, 5
    %p159 = pnand %p157, %p158
    %p160 = pneg %p159
    // Predicated region
    $region29: #{_qalign_forward_jit.1} parent=5 // pred_check
      _
    $region30: #{_qalign_forward_jit.1} parent=5 // pred_check_branch
      %162 = sbr.rel (%p159) target = $region32
    $region31: #{_qalign_forward_jit.1} parent=5 // pred_region
      %s163 = ssub.s32 %s9, 1
      %s164 = smul.u32 %s18, 2
      %s165 = sadd.s32 %s164, %s19
      %s166 = smul.u32 64, %s165
      %p167 = scmp.lt.s32.totalorder %s166, 255
      %s168 = scalar_select %p167, %s166, 255
      %s169 = smul.addr %s168, 4
      %s170 = scalar_lea.vmem %s0, %s169
      %p171 = pneg %p51
      %p172 = pneg %p48
      %p173 = pneg %p72
      %p174 = pneg %p69
      %p175 = pneg %p93
      %p176 = pneg %p90
      %p177 = pneg %p119
      %p178 = pneg %p116
      %p179 = scmp.lt.s32.totalorder %s18, 1
      %s180 = scalar_select %p179, %s18, 1
      %s181 = smul.addr %s180, 8
      %s182 = scalar_lea.vmem %s3, %s181
      %s183 = smul.u32 %s18, 2
      %s184 = sadd.s32 %s183, %s19
      %s185 = smul.u32 64, %s184
      %p186 = scmp.lt.s32.totalorder %s185, 255
      %s187 = scalar_select %p186, %s185, 255
      %s188 = smul.addr %s187, 4
      %s189 = scalar_lea.vmem %s0, %s188
      %s190 = smul.u32 %s18, 2
      %s191 = sadd.s32 %s190, %s19
      %s192 = smul.u32 64, %s191
      %p193 = scmp.lt.s32.totalorder %s18, 1
      %s194 = scalar_select %p193, %s18, 1
      %s195 = smul.addr %s194, 8
      %s196 = scalar_lea.vmem %s3, %s195
      %p198 = scmp.eq.s32.totalorder %s19, 0
      // Predicated region
      $region33: #{_qalign_forward_jit.1} parent=31 // pred_check
        %p199 = pneg %p198
      $region34: #{_qalign_forward_jit.1} parent=31 // pred_check_branch
        %201 = sbr.rel (%p199) target = $region36
      $region35: #{_qalign_forward_jit.1} parent=31 // pred_region
        %202 = vst [vmem:[%s196] sm:$0xff] 0.0
      $region36: #{_qalign_forward_jit.1} parent=31 // pred_fallthru
        _
      %v203 = vld [vmem:[%s189] sm:$0xf]
      %v204 = vld [vmem:[%s189 + $0x4] sm:$0xf]
      %v205 = vld [vmem:[%s189 + $0x8] sm:$0xf]
      %v206 = vld [vmem:[%s189 + $0xc] sm:$0xf]
      %v207 = vld [vmem:[%s189 + $0x10] sm:$0xf]
      %v208 = vld [vmem:[%s189 + $0x14] sm:$0xf]
      %v209 = vld [vmem:[%s189 + $0x18] sm:$0xf]
      %v210 = vld [vmem:[%s189 + $0x1c] sm:$0xf]
      %v211 = vld [vmem:[%s189 + $0x20] sm:$0xf]
      %v212 = vld [vmem:[%s189 + $0x24] sm:$0xf]
      %v213 = vld [vmem:[%s189 + $0x28] sm:$0xf]
      %v214 = vld [vmem:[%s189 + $0x2c] sm:$0xf]
      %v215 = vld [vmem:[%s189 + $0x30] sm:$0xf]
      %v216 = vld [vmem:[%s189 + $0x34] sm:$0xf]
      %v217 = vld [vmem:[%s189 + $0x38] sm:$0xf]
      %v218 = vld [vmem:[%s189 + $0x3c] sm:$0xf]
      %v219 = vld [vmem:[%s189 + $0x40] sm:$0xf]
      %v220 = vld [vmem:[%s189 + $0x44] sm:$0xf]
      %v221 = vld [vmem:[%s189 + $0x48] sm:$0xf]
      %v222 = vld [vmem:[%s189 + $0x4c] sm:$0xf]
      %v223 = vld [vmem:[%s189 + $0x50] sm:$0xf]
      %v224 = vld [vmem:[%s189 + $0x54] sm:$0xf]
      %v225 = vld [vmem:[%s189 + $0x58] sm:$0xf]
      %v226 = vld [vmem:[%s189 + $0x5c] sm:$0xf]
      %v227 = vld [vmem:[%s189 + $0x60] sm:$0xf]
      %v228 = vld [vmem:[%s189 + $0x64] sm:$0xf]
      %v229 = vld [vmem:[%s189 + $0x68] sm:$0xf]
      %v230 = vld [vmem:[%s189 + $0x6c] sm:$0xf]
      %v231 = vld [vmem:[%s189 + $0x70] sm:$0xf]
      %v232 = vld [vmem:[%s189 + $0x74] sm:$0xf]
      %v233 = vld [vmem:[%s189 + $0x78] sm:$0xf]
      %v234 = vld [vmem:[%s189 + $0x7c] sm:$0xf]
      %v235 = vld [vmem:[%s189 + $0x80] sm:$0xf]
      %v236 = vld [vmem:[%s189 + $0x84] sm:$0xf]
      %v237 = vld [vmem:[%s189 + $0x88] sm:$0xf]
      %v238 = vld [vmem:[%s189 + $0x8c] sm:$0xf]
      %v239 = vld [vmem:[%s189 + $0x90] sm:$0xf]
      %v240 = vld [vmem:[%s189 + $0x94] sm:$0xf]
      %v241 = vld [vmem:[%s189 + $0x98] sm:$0xf]
      %v242 = vld [vmem:[%s189 + $0x9c] sm:$0xf]
      %v243 = vld [vmem:[%s189 + $0xa0] sm:$0xf]
      %v244 = vld [vmem:[%s189 + $0xa4] sm:$0xf]
      %v245 = vld [vmem:[%s189 + $0xa8] sm:$0xf]
      %v246 = vld [vmem:[%s189 + $0xac] sm:$0xf]
      %v247 = vld [vmem:[%s189 + $0xb0] sm:$0xf]
      %v248 = vld [vmem:[%s189 + $0xb4] sm:$0xf]
      %v249 = vld [vmem:[%s189 + $0xb8] sm:$0xf]
      %v250 = vld [vmem:[%s189 + $0xbc] sm:$0xf]
      %v251 = vld [vmem:[%s189 + $0xc0] sm:$0xf]
      %v252 = vld [vmem:[%s189 + $0xc4] sm:$0xf]
      %v253 = vld [vmem:[%s189 + $0xc8] sm:$0xf]
      %v254 = vld [vmem:[%s189 + $0xcc] sm:$0xf]
      %v255 = vld [vmem:[%s189 + $0xd0] sm:$0xf]
      %v256 = vld [vmem:[%s189 + $0xd4] sm:$0xf]
      %v257 = vld [vmem:[%s189 + $0xd8] sm:$0xf]
      %v258 = vld [vmem:[%s189 + $0xdc] sm:$0xf]
      %v259 = vld [vmem:[%s189 + $0xe0] sm:$0xf]
      %v260 = vld [vmem:[%s189 + $0xe4] sm:$0xf]
      %v261 = vld [vmem:[%s189 + $0xe8] sm:$0xf]
      %v262 = vld [vmem:[%s189 + $0xec] sm:$0xf]
      %v263 = vld [vmem:[%s189 + $0xf0] sm:$0xf]
      %v264 = vld [vmem:[%s189 + $0xf4] sm:$0xf]
      %v265 = vld [vmem:[%s189 + $0xf8] sm:$0xf]
      %v266 = vld [vmem:[%s189 + $0xfc] sm:$0xf]
      %v267 = vld [vmem:[%s1] sm:$0xf]
      %v268 = vld [vmem:[%s1 + $0x4] sm:$0xf]
      %v269 = vld [vmem:[%s1 + $0x8] sm:$0xf]
      %v270 = vld [vmem:[%s1 + $0xc] sm:$0xf]
      %v271 = vld [vmem:[%s1 + $0x10] sm:$0xf]
      %v272 = vld [vmem:[%s1 + $0x14] sm:$0xf]
      %v273 = vld [vmem:[%s2] sm:$0x1]
      %v275 = vlaneseq
      %v276 = vshrl.u32 %v275, 7
      %v277 = vsub.s32 0, %v276
      %v278 = vrot.slane %v273, %v277
      %v344 = vunpack.c.l.b16 %v203
      %v345 = vunpack.c.l.b16 %v204
      %v346 = vunpack.c.l.b16 %v205
      %v347 = vunpack.c.l.b16 %v206
      %v348 = vunpack.c.l.b16 %v207
      %v349 = vunpack.c.l.b16 %v208
      %v350 = vunpack.c.l.b16 %v209
      %v351 = vunpack.c.l.b16 %v210
      %v352 = vunpack.c.l.b16 %v211
      %v353 = vunpack.c.l.b16 %v212
      %v354 = vunpack.c.l.b16 %v213
      %v355 = vunpack.c.l.b16 %v214
      %v356 = vunpack.c.l.b16 %v215
      %v357 = vunpack.c.l.b16 %v216
      %v358 = vunpack.c.l.b16 %v217
      %v359 = vunpack.c.l.b16 %v218
      %v360 = vunpack.c.l.b16 %v219
      %v361 = vunpack.c.l.b16 %v220
      %v362 = vunpack.c.l.b16 %v221
      %v363 = vunpack.c.l.b16 %v222
      %v364 = vunpack.c.l.b16 %v223
      %v365 = vunpack.c.l.b16 %v224
      %v366 = vunpack.c.l.b16 %v225
      %v367 = vunpack.c.l.b16 %v226
      %v368 = vunpack.c.l.b16 %v227
      %v369 = vunpack.c.l.b16 %v228
      %v370 = vunpack.c.l.b16 %v229
      %v371 = vunpack.c.l.b16 %v230
      %v372 = vunpack.c.l.b16 %v231
      %v373 = vunpack.c.l.b16 %v232
      %v374 = vunpack.c.l.b16 %v233
      %v375 = vunpack.c.l.b16 %v234
      %v376 = vunpack.c.l.b16 %v235
      %v377 = vunpack.c.l.b16 %v236
      %v378 = vunpack.c.l.b16 %v237
      %v379 = vunpack.c.l.b16 %v238
      %v380 = vunpack.c.l.b16 %v239
      %v381 = vunpack.c.l.b16 %v240
      %v382 = vunpack.c.l.b16 %v241
      %v383 = vunpack.c.l.b16 %v242
      %v384 = vunpack.c.l.b16 %v243
      %v385 = vunpack.c.l.b16 %v244
      %v386 = vunpack.c.l.b16 %v245
      %v387 = vunpack.c.l.b16 %v246
      %v388 = vunpack.c.l.b16 %v247
      %v389 = vunpack.c.l.b16 %v248
      %v390 = vunpack.c.l.b16 %v249
      %v391 = vunpack.c.l.b16 %v250
      %v392 = vunpack.c.l.b16 %v251
      %v393 = vunpack.c.l.b16 %v252
      %v394 = vunpack.c.l.b16 %v253
      %v395 = vunpack.c.l.b16 %v254
      %v396 = vunpack.c.l.b16 %v255
      %v397 = vunpack.c.l.b16 %v256
      %v398 = vunpack.c.l.b16 %v257
      %v399 = vunpack.c.l.b16 %v258
      %v400 = vunpack.c.l.b16 %v259
      %v401 = vunpack.c.l.b16 %v260
      %v402 = vunpack.c.l.b16 %v261
      %v403 = vunpack.c.l.b16 %v262
      %v404 = vunpack.c.l.b16 %v263
      %v405 = vunpack.c.l.b16 %v264
      %v406 = vunpack.c.l.b16 %v265
      %v407 = vunpack.c.l.b16 %v266
      %v408 = vpack.c.b16 %v345, %v344
      %v409 = vpack.c.b16 %v347, %v346
      %v410 = vpack.c.b16 %v349, %v348
      %v411 = vpack.c.b16 %v351, %v350
      %v412 = vpack.c.b16 %v353, %v352
      %v413 = vpack.c.b16 %v355, %v354
      %v414 = vpack.c.b16 %v357, %v356
      %v415 = vpack.c.b16 %v359, %v358
      %v416 = vpack.c.b16 %v361, %v360
      %v417 = vpack.c.b16 %v363, %v362
      %v418 = vpack.c.b16 %v365, %v364
      %v419 = vpack.c.b16 %v367, %v366
      %v420 = vpack.c.b16 %v369, %v368
      %v421 = vpack.c.b16 %v371, %v370
      %v422 = vpack.c.b16 %v373, %v372
      %v423 = vpack.c.b16 %v375, %v374
      %v424 = vpack.c.b16 %v377, %v376
      %v425 = vpack.c.b16 %v379, %v378
      %v426 = vpack.c.b16 %v381, %v380
      %v427 = vpack.c.b16 %v383, %v382
      %v428 = vpack.c.b16 %v385, %v384
      %v429 = vpack.c.b16 %v387, %v386
      %v430 = vpack.c.b16 %v389, %v388
      %v431 = vpack.c.b16 %v391, %v390
      %v432 = vpack.c.b16 %v393, %v392
      %v433 = vpack.c.b16 %v395, %v394
      %v434 = vpack.c.b16 %v397, %v396
      %v435 = vpack.c.b16 %v399, %v398
      %v436 = vpack.c.b16 %v401, %v400
      %v437 = vpack.c.b16 %v403, %v402
      %v438 = vpack.c.b16 %v405, %v404
      %v439 = vpack.c.b16 %v407, %v406
      %v446 = vunpack.c.l.b16 %v267
      %v447 = vunpack.c.l.b16 %v268
      %v448 = vunpack.c.l.b16 %v269
      %v449 = vunpack.c.l.b16 %v270
      %v450 = vunpack.c.l.b16 %v271
      %v451 = vunpack.c.l.b16 %v272
      %v452 = vpack.c.b16 %v447, %v446
      %v453 = vpack.c.b16 %v449, %v448
      %v454 = vpack.c.b16 %v451, %v450
      %vm458 = vcmask 392192
      %v460 = vsel %vm458, %v408, 0
      %v463 = vsel %vm458, %v409, 0
      %v466 = vsel %vm458, %v410, 0
      %v469 = vsel %vm458, %v411, 0
      %v472 = vsel %vm458, %v412, 0
      %v475 = vsel %vm458, %v413, 0
      %v478 = vsel %vm458, %v414, 0
      %v481 = vsel %vm458, %v415, 0
      %v484 = vsel %vm458, %v416, 0
      %v487 = vsel %vm458, %v417, 0
      %v490 = vsel %vm458, %v418, 0
      %v493 = vsel %vm458, %v419, 0
      %v496 = vsel %vm458, %v420, 0
      %v499 = vsel %vm458, %v421, 0
      %v502 = vsel %vm458, %v422, 0
      %v505 = vsel %vm458, %v423, 0
      %v508 = vsel %vm458, %v424, 0
      %v511 = vsel %vm458, %v425, 0
      %v514 = vsel %vm458, %v426, 0
      %v517 = vsel %vm458, %v427, 0
      %v520 = vsel %vm458, %v428, 0
      %v523 = vsel %vm458, %v429, 0
      %v526 = vsel %vm458, %v430, 0
      %v529 = vsel %vm458, %v431, 0
      %v532 = vsel %vm458, %v432, 0
      %v535 = vsel %vm458, %v433, 0
      %v538 = vsel %vm458, %v434, 0
      %v541 = vsel %vm458, %v435, 0
      %v544 = vsel %vm458, %v436, 0
      %v547 = vsel %vm458, %v437, 0
      %v550 = vsel %vm458, %v438, 0
      %v553 = vsel %vm458, %v439, 0
      %555 = vmatprep.subr.bf16.mxu0 0
      %556 = vmatpush1.bf16.msra.mxu0 0
      %557 = vmatprep.subr.bf16.mxu0 0
      %558 = vmatpush1.bf16.msra.mxu0 0
      %559 = vmatprep.subr.bf16.mxu0 0
      %560 = vmatpush1.bf16.msra.mxu0 0
      %561 = vmatprep.subr.bf16.mxu0 0
      %562 = vmatpush1.bf16.msra.mxu0 0
      %563 = vmatprep.subr.bf16.mxu0 0
      %564 = vmatpush1.bf16.msra.mxu0 0
      %565 = vmatprep.subr.bf16.mxu0 0
      %566 = vmatpush1.bf16.msra.mxu0 %v454
      %567 = vmatprep.subr.bf16.mxu0 0
      %568 = vmatpush1.bf16.msra.mxu0 %v453
      %569 = vmatprep.subr.bf16.mxu0 0
      %570 = vmatpush1.bf16.msra.mxu0 %v452
      %571 = vmatprep.subr.bf16.mxu0 0
      %572 = vmatpush2.bf16.msra.mxu0 0
      %573 = vmatprep.subr.bf16.mxu0 0
      %574 = vmatpush2.bf16.msra.mxu0 0
      %575 = vmatprep.subr.bf16.mxu0 0
      %576 = vmatpush2.bf16.msra.mxu0 0
      %577 = vmatprep.subr.bf16.mxu0 0
      %578 = vmatpush2.bf16.msra.mxu0 0
      %579 = vmatprep.subr.bf16.mxu0 0
      %580 = vmatpush2.bf16.msra.mxu0 0
      %581 = vmatprep.subr.bf16.mxu0 0
      %582 = vmatpush2.bf16.msra.mxu0 0
      %583 = vmatprep.subr.bf16.mxu0 0
      %584 = vmatpush2.bf16.msra.mxu0 0
      %585 = vmatprep.subr.bf16.mxu0 0
      %586 = vmatpush2.bf16.msra.mxu0 0
      %587 = vmatprep.mubr.bf16.mxu0 0
      %588 = vmatmul.mubr.bf16.gmra.mxu0 %v460
      %v589 = vpop.f32.mrf.mxu0
      %v590 = vadd.f32 %v278, %v589
      %v591 = vpop.f32.mrf.mxu0
      %v592 = vpop.f32.mrf.mxu0
      %v593 = vadd.f32 %v278, %v592
      %v594 = vpop.f32.mrf.mxu0
      %595 = vmatprep.mubr.bf16.mxu0 0
      %596 = vmatmul.mubr.bf16.gmra.mxu0 %v463
      %v597 = vpop.f32.mrf.mxu0
      %v598 = vadd.f32 %v278, %v597
      %v599 = vpop.f32.mrf.mxu0
      %v600 = vpop.f32.mrf.mxu0
      %v601 = vadd.f32 %v278, %v600
      %v602 = vpop.f32.mrf.mxu0
      %603 = vmatprep.mubr.bf16.mxu0 0
      %604 = vmatmul.mubr.bf16.gmra.mxu0 %v466
      %v605 = vpop.f32.mrf.mxu0
      %v606 = vadd.f32 %v278, %v605
      %v607 = vpop.f32.mrf.mxu0
      %v608 = vpop.f32.mrf.mxu0
      %v609 = vadd.f32 %v278, %v608
      %v610 = vpop.f32.mrf.mxu0
      %611 = vmatprep.mubr.bf16.mxu0 0
      %612 = vmatmul.mubr.bf16.gmra.mxu0 %v469
      %v613 = vpop.f32.mrf.mxu0
      %v614 = vadd.f32 %v278, %v613
      %v615 = vpop.f32.mrf.mxu0
      %v616 = vpop.f32.mrf.mxu0
      %v617 = vadd.f32 %v278, %v616
      %v618 = vpop.f32.mrf.mxu0
      %619 = vmatprep.mubr.bf16.mxu0 0
      %620 = vmatmul.mubr.bf16.gmra.mxu0 %v472
      %v621 = vpop.f32.mrf.mxu0
      %v622 = vadd.f32 %v278, %v621
      %v623 = vpop.f32.mrf.mxu0
      %v624 = vpop.f32.mrf.mxu0
      %v625 = vadd.f32 %v278, %v624
      %v626 = vpop.f32.mrf.mxu0
      %627 = vmatprep.mubr.bf16.mxu0 0
      %628 = vmatmul.mubr.bf16.gmra.mxu0 %v475
      %v629 = vpop.f32.mrf.mxu0
      %v630 = vadd.f32 %v278, %v629
      %v631 = vpop.f32.mrf.mxu0
      %v632 = vpop.f32.mrf.mxu0
      %v633 = vadd.f32 %v278, %v632
      %v634 = vpop.f32.mrf.mxu0
      %635 = vmatprep.mubr.bf16.mxu0 0
      %636 = vmatmul.mubr.bf16.gmra.mxu0 %v478
      %v637 = vpop.f32.mrf.mxu0
      %v638 = vadd.f32 %v278, %v637
      %v639 = vpop.f32.mrf.mxu0
      %v640 = vpop.f32.mrf.mxu0
      %v641 = vadd.f32 %v278, %v640
      %v642 = vpop.f32.mrf.mxu0
      %643 = vmatprep.mubr.bf16.mxu0 0
      %644 = vmatmul.mubr.bf16.gmra.mxu0 %v481
      %v645 = vpop.f32.mrf.mxu0
      %v646 = vadd.f32 %v278, %v645
      %v647 = vpop.f32.mrf.mxu0
      %v648 = vpop.f32.mrf.mxu0
      %v649 = vadd.f32 %v278, %v648
      %v650 = vpop.f32.mrf.mxu0
      %651 = vmatprep.mubr.bf16.mxu0 0
      %652 = vmatmul.mubr.bf16.gmra.mxu0 %v484
      %v653 = vpop.f32.mrf.mxu0
      %v654 = vadd.f32 %v278, %v653
      %v655 = vpop.f32.mrf.mxu0
      %v656 = vpop.f32.mrf.mxu0
      %v657 = vadd.f32 %v278, %v656
      %v658 = vpop.f32.mrf.mxu0
      %659 = vmatprep.mubr.bf16.mxu0 0
      %660 = vmatmul.mubr.bf16.gmra.mxu0 %v487
      %v661 = vpop.f32.mrf.mxu0
      %v662 = vadd.f32 %v278, %v661
      %v663 = vpop.f32.mrf.mxu0
      %v664 = vpop.f32.mrf.mxu0
      %v665 = vadd.f32 %v278, %v664
      %v666 = vpop.f32.mrf.mxu0
      %667 = vmatprep.mubr.bf16.mxu0 0
      %668 = vmatmul.mubr.bf16.gmra.mxu0 %v490
      %v669 = vpop.f32.mrf.mxu0
      %v670 = vadd.f32 %v278, %v669
      %v671 = vpop.f32.mrf.mxu0
      %v672 = vpop.f32.mrf.mxu0
      %v673 = vadd.f32 %v278, %v672
      %v674 = vpop.f32.mrf.mxu0
      %675 = vmatprep.mubr.bf16.mxu0 0
      %676 = vmatmul.mubr.bf16.gmra.mxu0 %v493
      %v677 = vpop.f32.mrf.mxu0
      %v678 = vadd.f32 %v278, %v677
      %v679 = vpop.f32.mrf.mxu0
      %v680 = vpop.f32.mrf.mxu0
      %v681 = vadd.f32 %v278, %v680
      %v682 = vpop.f32.mrf.mxu0
      %683 = vmatprep.mubr.bf16.mxu0 0
      %684 = vmatmul.mubr.bf16.gmra.mxu0 %v496
      %v685 = vpop.f32.mrf.mxu0
      %v686 = vadd.f32 %v278, %v685
      %v687 = vpop.f32.mrf.mxu0
      %v688 = vpop.f32.mrf.mxu0
      %v689 = vadd.f32 %v278, %v688
      %v690 = vpop.f32.mrf.mxu0
      %691 = vmatprep.mubr.bf16.mxu0 0
      %692 = vmatmul.mubr.bf16.gmra.mxu0 %v499
      %v693 = vpop.f32.mrf.mxu0
      %v694 = vadd.f32 %v278, %v693
      %v695 = vpop.f32.mrf.mxu0
      %v696 = vpop.f32.mrf.mxu0
      %v697 = vadd.f32 %v278, %v696
      %v698 = vpop.f32.mrf.mxu0
      %699 = vmatprep.mubr.bf16.mxu0 0
      %700 = vmatmul.mubr.bf16.gmra.mxu0 %v502
      %v701 = vpop.f32.mrf.mxu0
      %v702 = vadd.f32 %v278, %v701
      %v703 = vpop.f32.mrf.mxu0
      %v704 = vpop.f32.mrf.mxu0
      %v705 = vadd.f32 %v278, %v704
      %v706 = vpop.f32.mrf.mxu0
      %707 = vmatprep.mubr.bf16.mxu0 0
      %708 = vmatmul.mubr.bf16.gmra.mxu0 %v505
      %v709 = vpop.f32.mrf.mxu0
      %v710 = vadd.f32 %v278, %v709
      %v711 = vpop.f32.mrf.mxu0
      %v712 = vpop.f32.mrf.mxu0
      %v713 = vadd.f32 %v278, %v712
      %v714 = vpop.f32.mrf.mxu0
      %715 = vmatprep.mubr.bf16.mxu0 0
      %716 = vmatmul.mubr.bf16.gmra.mxu0 %v508
      %v717 = vpop.f32.mrf.mxu0
      %v718 = vadd.f32 %v278, %v717
      %v719 = vpop.f32.mrf.mxu0
      %v720 = vpop.f32.mrf.mxu0
      %v721 = vadd.f32 %v278, %v720
      %v722 = vpop.f32.mrf.mxu0
      %723 = vmatprep.mubr.bf16.mxu0 0
      %724 = vmatmul.mubr.bf16.gmra.mxu0 %v511
      %v725 = vpop.f32.mrf.mxu0
      %v726 = vadd.f32 %v278, %v725
      %v727 = vpop.f32.mrf.mxu0
      %v728 = vpop.f32.mrf.mxu0
      %v729 = vadd.f32 %v278, %v728
      %v730 = vpop.f32.mrf.mxu0
      %731 = vmatprep.mubr.bf16.mxu0 0
      %732 = vmatmul.mubr.bf16.gmra.mxu0 %v514
      %v733 = vpop.f32.mrf.mxu0
      %v734 = vadd.f32 %v278, %v733
      %v735 = vpop.f32.mrf.mxu0
      %v736 = vpop.f32.mrf.mxu0
      %v737 = vadd.f32 %v278, %v736
      %v738 = vpop.f32.mrf.mxu0
      %739 = vmatprep.mubr.bf16.mxu0 0
      %740 = vmatmul.mubr.bf16.gmra.mxu0 %v517
      %v741 = vpop.f32.mrf.mxu0
      %v742 = vadd.f32 %v278, %v741
      %v743 = vpop.f32.mrf.mxu0
      %v744 = vpop.f32.mrf.mxu0
      %v745 = vadd.f32 %v278, %v744
      %v746 = vpop.f32.mrf.mxu0
      %747 = vmatprep.mubr.bf16.mxu0 0
      %748 = vmatmul.mubr.bf16.gmra.mxu0 %v520
      %v749 = vpop.f32.mrf.mxu0
      %v750 = vadd.f32 %v278, %v749
      %v751 = vpop.f32.mrf.mxu0
      %v752 = vpop.f32.mrf.mxu0
      %v753 = vadd.f32 %v278, %v752
      %v754 = vpop.f32.mrf.mxu0
      %755 = vmatprep.mubr.bf16.mxu0 0
      %756 = vmatmul.mubr.bf16.gmra.mxu0 %v523
      %v757 = vpop.f32.mrf.mxu0
      %v758 = vadd.f32 %v278, %v757
      %v759 = vpop.f32.mrf.mxu0
      %v760 = vpop.f32.mrf.mxu0
      %v761 = vadd.f32 %v278, %v760
      %v762 = vpop.f32.mrf.mxu0
      %763 = vmatprep.mubr.bf16.mxu0 0
      %764 = vmatmul.mubr.bf16.gmra.mxu0 %v526
      %v765 = vpop.f32.mrf.mxu0
      %v766 = vadd.f32 %v278, %v765
      %v767 = vpop.f32.mrf.mxu0
      %v768 = vpop.f32.mrf.mxu0
      %v769 = vadd.f32 %v278, %v768
      %v770 = vpop.f32.mrf.mxu0
      %771 = vmatprep.mubr.bf16.mxu0 0
      %772 = vmatmul.mubr.bf16.gmra.mxu0 %v529
      %v773 = vpop.f32.mrf.mxu0
      %v774 = vadd.f32 %v278, %v773
      %v775 = vpop.f32.mrf.mxu0
      %v776 = vpop.f32.mrf.mxu0
      %v777 = vadd.f32 %v278, %v776
      %v778 = vpop.f32.mrf.mxu0
      %779 = vmatprep.mubr.bf16.mxu0 0
      %780 = vmatmul.mubr.bf16.gmra.mxu0 %v532
      %v781 = vpop.f32.mrf.mxu0
      %v782 = vadd.f32 %v278, %v781
      %v783 = vpop.f32.mrf.mxu0
      %v784 = vpop.f32.mrf.mxu0
      %v785 = vadd.f32 %v278, %v784
      %v786 = vpop.f32.mrf.mxu0
      %787 = vmatprep.mubr.bf16.mxu0 0
      %788 = vmatmul.mubr.bf16.gmra.mxu0 %v535
      %v789 = vpop.f32.mrf.mxu0
      %v790 = vadd.f32 %v278, %v789
      %v791 = vpop.f32.mrf.mxu0
      %v792 = vpop.f32.mrf.mxu0
      %v793 = vadd.f32 %v278, %v792
      %v794 = vpop.f32.mrf.mxu0
      %795 = vmatprep.mubr.bf16.mxu0 0
      %796 = vmatmul.mubr.bf16.gmra.mxu0 %v538
      %v797 = vpop.f32.mrf.mxu0
      %v798 = vadd.f32 %v278, %v797
      %v799 = vpop.f32.mrf.mxu0
      %v800 = vpop.f32.mrf.mxu0
      %v801 = vadd.f32 %v278, %v800
      %v802 = vpop.f32.mrf.mxu0
      %803 = vmatprep.mubr.bf16.mxu0 0
      %804 = vmatmul.mubr.bf16.gmra.mxu0 %v541
      %v805 = vpop.f32.mrf.mxu0
      %v806 = vadd.f32 %v278, %v805
      %v807 = vpop.f32.mrf.mxu0
      %v808 = vpop.f32.mrf.mxu0
      %v809 = vadd.f32 %v278, %v808
      %v810 = vpop.f32.mrf.mxu0
      %811 = vmatprep.mubr.bf16.mxu0 0
      %812 = vmatmul.mubr.bf16.gmra.mxu0 %v544
      %v813 = vpop.f32.mrf.mxu0
      %v814 = vadd.f32 %v278, %v813
      %v815 = vpop.f32.mrf.mxu0
      %v816 = vpop.f32.mrf.mxu0
      %v817 = vadd.f32 %v278, %v816
      %v818 = vpop.f32.mrf.mxu0
      %819 = vmatprep.mubr.bf16.mxu0 0
      %820 = vmatmul.mubr.bf16.gmra.mxu0 %v547
      %v821 = vpop.f32.mrf.mxu0
      %v822 = vadd.f32 %v278, %v821
      %v823 = vpop.f32.mrf.mxu0
      %v824 = vpop.f32.mrf.mxu0
      %v825 = vadd.f32 %v278, %v824
      %v826 = vpop.f32.mrf.mxu0
      %827 = vmatprep.mubr.bf16.mxu0 0
      %828 = vmatmul.mubr.bf16.gmra.mxu0 %v550
      %v829 = vpop.f32.mrf.mxu0
      %v830 = vadd.f32 %v278, %v829
      %v831 = vpop.f32.mrf.mxu0
      %v832 = vpop.f32.mrf.mxu0
      %v833 = vadd.f32 %v278, %v832
      %v834 = vpop.f32.mrf.mxu0
      %835 = vmatprep.mubr.bf16.mxu0 0
      %836 = vmatmul.mubr.bf16.gmra.mxu0 %v553
      %v837 = vpop.f32.mrf.mxu0
      %v838 = vadd.f32 %v278, %v837
      %v839 = vpop.f32.mrf.mxu0
      %v840 = vpop.f32.mrf.mxu0
      %v841 = vadd.f32 %v278, %v840
      %v842 = vpop.f32.mrf.mxu0
      %843 = vdwg.mxu0
      %v844 = vmul.f32 %v590, %v590
      %v845 = vmul.f32 %v593, %v593
      %v846 = vmul.f32 %v598, %v598
      %v847 = vmul.f32 %v601, %v601
      %v848 = vmul.f32 %v606, %v606
      %v849 = vmul.f32 %v609, %v609
      %v850 = vmul.f32 %v614, %v614
      %v851 = vmul.f32 %v617, %v617
      %v852 = vmul.f32 %v622, %v622
      %v853 = vmul.f32 %v625, %v625
      %v854 = vmul.f32 %v630, %v630
      %v855 = vmul.f32 %v633, %v633
      %v856 = vmul.f32 %v638, %v638
      %v857 = vmul.f32 %v641, %v641
      %v858 = vmul.f32 %v646, %v646
      %v859 = vmul.f32 %v649, %v649
      %v860 = vmul.f32 %v654, %v654
      %v861 = vmul.f32 %v657, %v657
      %v862 = vmul.f32 %v662, %v662
      %v863 = vmul.f32 %v665, %v665
      %v864 = vmul.f32 %v670, %v670
      %v865 = vmul.f32 %v673, %v673
      %v866 = vmul.f32 %v678, %v678
      %v867 = vmul.f32 %v681, %v681
      %v868 = vmul.f32 %v686, %v686
      %v869 = vmul.f32 %v689, %v689
      %v870 = vmul.f32 %v694, %v694
      %v871 = vmul.f32 %v697, %v697
      %v872 = vmul.f32 %v702, %v702
      %v873 = vmul.f32 %v705, %v705
      %v874 = vmul.f32 %v710, %v710
      %v875 = vmul.f32 %v713, %v713
      %v876 = vmul.f32 %v718, %v718
      %v877 = vmul.f32 %v721, %v721
      %v878 = vmul.f32 %v726, %v726
      %v879 = vmul.f32 %v729, %v729
      %v880 = vmul.f32 %v734, %v734
      %v881 = vmul.f32 %v737, %v737
      %v882 = vmul.f32 %v742, %v742
      %v883 = vmul.f32 %v745, %v745
      %v884 = vmul.f32 %v750, %v750
      %v885 = vmul.f32 %v753, %v753
      %v886 = vmul.f32 %v758, %v758
      %v887 = vmul.f32 %v761, %v761
      %v888 = vmul.f32 %v766, %v766
      %v889 = vmul.f32 %v769, %v769
      %v890 = vmul.f32 %v774, %v774
      %v891 = vmul.f32 %v777, %v777
      %v892 = vmul.f32 %v782, %v782
      %v893 = vmul.f32 %v785, %v785
      %v894 = vmul.f32 %v790, %v790
      %v895 = vmul.f32 %v793, %v793
      %v896 = vmul.f32 %v798, %v798
      %v897 = vmul.f32 %v801, %v801
      %v898 = vmul.f32 %v806, %v806
      %v899 = vmul.f32 %v809, %v809
      %v900 = vmul.f32 %v814, %v814
      %v901 = vmul.f32 %v817, %v817
      %v902 = vmul.f32 %v822, %v822
      %v903 = vmul.f32 %v825, %v825
      %v904 = vmul.f32 %v830, %v830
      %v905 = vmul.f32 %v833, %v833
      %v906 = vmul.f32 %v838, %v838
      %v907 = vmul.f32 %v841, %v841
      %v908 = vmul.f32 %v590, %v844
      %v909 = vmul.f32 %v593, %v845
      %v910 = vmul.f32 %v598, %v846
      %v911 = vmul.f32 %v601, %v847
      %v912 = vmul.f32 %v606, %v848
      %v913 = vmul.f32 %v609, %v849
      %v914 = vmul.f32 %v614, %v850
      %v915 = vmul.f32 %v617, %v851
      %v916 = vmul.f32 %v622, %v852
      %v917 = vmul.f32 %v625, %v853
      %v918 = vmul.f32 %v630, %v854
      %v919 = vmul.f32 %v633, %v855
      %v920 = vmul.f32 %v638, %v856
      %v921 = vmul.f32 %v641, %v857
      %v922 = vmul.f32 %v646, %v858
      %v923 = vmul.f32 %v649, %v859
      %v924 = vmul.f32 %v654, %v860
      %v925 = vmul.f32 %v657, %v861
      %v926 = vmul.f32 %v662, %v862
      %v927 = vmul.f32 %v665, %v863
      %v928 = vmul.f32 %v670, %v864
      %v929 = vmul.f32 %v673, %v865
      %v930 = vmul.f32 %v678, %v866
      %v931 = vmul.f32 %v681, %v867
      %v932 = vmul.f32 %v686, %v868
      %v933 = vmul.f32 %v689, %v869
      %v934 = vmul.f32 %v694, %v870
      %v935 = vmul.f32 %v697, %v871
      %v936 = vmul.f32 %v702, %v872
      %v937 = vmul.f32 %v705, %v873
      %v938 = vmul.f32 %v710, %v874
      %v939 = vmul.f32 %v713, %v875
      %v940 = vmul.f32 %v718, %v876
      %v941 = vmul.f32 %v721, %v877
      %v942 = vmul.f32 %v726, %v878
      %v943 = vmul.f32 %v729, %v879
      %v944 = vmul.f32 %v734, %v880
      %v945 = vmul.f32 %v737, %v881
      %v946 = vmul.f32 %v742, %v882
      %v947 = vmul.f32 %v745, %v883
      %v948 = vmul.f32 %v750, %v884
      %v949 = vmul.f32 %v753, %v885
      %v950 = vmul.f32 %v758, %v886
      %v951 = vmul.f32 %v761, %v887
      %v952 = vmul.f32 %v766, %v888
      %v953 = vmul.f32 %v769, %v889
      %v954 = vmul.f32 %v774, %v890
      %v955 = vmul.f32 %v777, %v891
      %v956 = vmul.f32 %v782, %v892
      %v957 = vmul.f32 %v785, %v893
      %v958 = vmul.f32 %v790, %v894
      %v959 = vmul.f32 %v793, %v895
      %v960 = vmul.f32 %v798, %v896
      %v961 = vmul.f32 %v801, %v897
      %v962 = vmul.f32 %v806, %v898
      %v963 = vmul.f32 %v809, %v899
      %v964 = vmul.f32 %v814, %v900
      %v965 = vmul.f32 %v817, %v901
      %v966 = vmul.f32 %v822, %v902
      %v967 = vmul.f32 %v825, %v903
      %v968 = vmul.f32 %v830, %v904
      %v969 = vmul.f32 %v833, %v905
      %v970 = vmul.f32 %v838, %v906
      %v971 = vmul.f32 %v841, %v907
      %v972 = vmul.f32 %v908, 0.044715
      %v973 = vmul.f32 %v909, 0.044715
      %v974 = vmul.f32 %v910, 0.044715
      %v975 = vmul.f32 %v911, 0.044715
      %v976 = vmul.f32 %v912, 0.044715
      %v977 = vmul.f32 %v913, 0.044715
      %v978 = vmul.f32 %v914, 0.044715
      %v979 = vmul.f32 %v915, 0.044715
      %v980 = vmul.f32 %v916, 0.044715
      %v981 = vmul.f32 %v917, 0.044715
      %v982 = vmul.f32 %v918, 0.044715
      %v983 = vmul.f32 %v919, 0.044715
      %v984 = vmul.f32 %v920, 0.044715
      %v985 = vmul.f32 %v921, 0.044715
      %v986 = vmul.f32 %v922, 0.044715
      %v987 = vmul.f32 %v923, 0.044715
      %v988 = vmul.f32 %v924, 0.044715
      %v989 = vmul.f32 %v925, 0.044715
      %v990 = vmul.f32 %v926, 0.044715
      %v991 = vmul.f32 %v927, 0.044715
      %v992 = vmul.f32 %v928, 0.044715
      %v993 = vmul.f32 %v929, 0.044715
      %v994 = vmul.f32 %v930, 0.044715
      %v995 = vmul.f32 %v931, 0.044715
      %v996 = vmul.f32 %v932, 0.044715
      %v997 = vmul.f32 %v933, 0.044715
      %v998 = vmul.f32 %v934, 0.044715
      %v999 = vmul.f32 %v935, 0.044715
      %v1000 = vmul.f32 %v936, 0.044715
      %v1001 = vmul.f32 %v937, 0.044715
      %v1002 = vmul.f32 %v938, 0.044715
      %v1003 = vmul.f32 %v939, 0.044715
      %v1004 = vmul.f32 %v940, 0.044715
      %v1005 = vmul.f32 %v941, 0.044715
      %v1006 = vmul.f32 %v942, 0.044715
      %v1007 = vmul.f32 %v943, 0.044715
      %v1008 = vmul.f32 %v944, 0.044715
      %v1009 = vmul.f32 %v945, 0.044715
      %v1010 = vmul.f32 %v946, 0.044715
      %v1011 = vmul.f32 %v947, 0.044715
      %v1012 = vmul.f32 %v948, 0.044715
      %v1013 = vmul.f32 %v949, 0.044715
      %v1014 = vmul.f32 %v950, 0.044715
      %v1015 = vmul.f32 %v951, 0.044715
      %v1016 = vmul.f32 %v952, 0.044715
      %v1017 = vmul.f32 %v953, 0.044715
      %v1018 = vmul.f32 %v954, 0.044715
      %v1019 = vmul.f32 %v955, 0.044715
      %v1020 = vmul.f32 %v956, 0.044715
      %v1021 = vmul.f32 %v957, 0.044715
      %v1022 = vmul.f32 %v958, 0.044715
      %v1023 = vmul.f32 %v959, 0.044715
      %v1024 = vmul.f32 %v960, 0.044715
      %v1025 = vmul.f32 %v961, 0.044715
      %v1026 = vmul.f32 %v962, 0.044715
      %v1027 = vmul.f32 %v963, 0.044715
      %v1028 = vmul.f32 %v964, 0.044715
      %v1029 = vmul.f32 %v965, 0.044715
      %v1030 = vmul.f32 %v966, 0.044715
      %v1031 = vmul.f32 %v967, 0.044715
      %v1032 = vmul.f32 %v968, 0.044715
      %v1033 = vmul.f32 %v969, 0.044715
      %v1034 = vmul.f32 %v970, 0.044715
      %v1035 = vmul.f32 %v971, 0.044715
      %v1036 = vadd.f32 %v590, %v972
      %v1037 = vadd.f32 %v593, %v973
      %v1038 = vadd.f32 %v598, %v974
      %v1039 = vadd.f32 %v601, %v975
      %v1040 = vadd.f32 %v606, %v976
      %v1041 = vadd.f32 %v609, %v977
      %v1042 = vadd.f32 %v614, %v978
      %v1043 = vadd.f32 %v617, %v979
      %v1044 = vadd.f32 %v622, %v980
      %v1045 = vadd.f32 %v625, %v981
      %v1046 = vadd.f32 %v630, %v982
      %v1047 = vadd.f32 %v633, %v983
      %v1048 = vadd.f32 %v638, %v984
      %v1049 = vadd.f32 %v641, %v985
      %v1050 = vadd.f32 %v646, %v986
      %v1051 = vadd.f32 %v649, %v987
      %v1052 = vadd.f32 %v654, %v988
      %v1053 = vadd.f32 %v657, %v989
      %v1054 = vadd.f32 %v662, %v990
      %v1055 = vadd.f32 %v665, %v991
      %v1056 = vadd.f32 %v670, %v992
      %v1057 = vadd.f32 %v673, %v993
      %v1058 = vadd.f32 %v678, %v994
      %v1059 = vadd.f32 %v681, %v995
      %v1060 = vadd.f32 %v686, %v996
      %v1061 = vadd.f32 %v689, %v997
      %v1062 = vadd.f32 %v694, %v998
      %v1063 = vadd.f32 %v697, %v999
      %v1064 = vadd.f32 %v702, %v1000
      %v1065 = vadd.f32 %v705, %v1001
      %v1066 = vadd.f32 %v710, %v1002
      %v1067 = vadd.f32 %v713, %v1003
      %v1068 = vadd.f32 %v718, %v1004
      %v1069 = vadd.f32 %v721, %v1005
      %v1070 = vadd.f32 %v726, %v1006
      %v1071 = vadd.f32 %v729, %v1007
      %v1072 = vadd.f32 %v734, %v1008
      %v1073 = vadd.f32 %v737, %v1009
      %v1074 = vadd.f32 %v742, %v1010
      %v1075 = vadd.f32 %v745, %v1011
      %v1076 = vadd.f32 %v750, %v1012
      %v1077 = vadd.f32 %v753, %v1013
      %v1078 = vadd.f32 %v758, %v1014
      %v1079 = vadd.f32 %v761, %v1015
      %v1080 = vadd.f32 %v766, %v1016
      %v1081 = vadd.f32 %v769, %v1017
      %v1082 = vadd.f32 %v774, %v1018
      %v1083 = vadd.f32 %v777, %v1019
      %v1084 = vadd.f32 %v782, %v1020
      %v1085 = vadd.f32 %v785, %v1021
      %v1086 = vadd.f32 %v790, %v1022
      %v1087 = vadd.f32 %v793, %v1023
      %v1088 = vadd.f32 %v798, %v1024
      %v1089 = vadd.f32 %v801, %v1025
      %v1090 = vadd.f32 %v806, %v1026
      %v1091 = vadd.f32 %v809, %v1027
      %v1092 = vadd.f32 %v814, %v1028
      %v1093 = vadd.f32 %v817, %v1029
      %v1094 = vadd.f32 %v822, %v1030
      %v1095 = vadd.f32 %v825, %v1031
      %v1096 = vadd.f32 %v830, %v1032
      %v1097 = vadd.f32 %v833, %v1033
      %v1098 = vadd.f32 %v838, %v1034
      %v1099 = vadd.f32 %v841, %v1035
      %v1100 = vmul.f32 %v1036, 0.7978846
      %v1101 = vmul.f32 %v1037, 0.7978846
      %v1102 = vmul.f32 %v1038, 0.7978846
      %v1103 = vmul.f32 %v1039, 0.7978846
      %v1104 = vmul.f32 %v1040, 0.7978846
      %v1105 = vmul.f32 %v1041, 0.7978846
      %v1106 = vmul.f32 %v1042, 0.7978846
      %v1107 = vmul.f32 %v1043, 0.7978846
      %v1108 = vmul.f32 %v1044, 0.7978846
      %v1109 = vmul.f32 %v1045, 0.7978846
      %v1110 = vmul.f32 %v1046, 0.7978846
      %v1111 = vmul.f32 %v1047, 0.7978846
      %v1112 = vmul.f32 %v1048, 0.7978846
      %v1113 = vmul.f32 %v1049, 0.7978846
      %v1114 = vmul.f32 %v1050, 0.7978846
      %v1115 = vmul.f32 %v1051, 0.7978846
      %v1116 = vmul.f32 %v1052, 0.7978846
      %v1117 = vmul.f32 %v1053, 0.7978846
      %v1118 = vmul.f32 %v1054, 0.7978846
      %v1119 = vmul.f32 %v1055, 0.7978846
      %v1120 = vmul.f32 %v1056, 0.7978846
      %v1121 = vmul.f32 %v1057, 0.7978846
      %v1122 = vmul.f32 %v1058, 0.7978846
      %v1123 = vmul.f32 %v1059, 0.7978846
      %v1124 = vmul.f32 %v1060, 0.7978846
      %v1125 = vmul.f32 %v1061, 0.7978846
      %v1126 = vmul.f32 %v1062, 0.7978846
      %v1127 = vmul.f32 %v1063, 0.7978846
      %v1128 = vmul.f32 %v1064, 0.7978846
      %v1129 = vmul.f32 %v1065, 0.7978846
      %v1130 = vmul.f32 %v1066, 0.7978846
      %v1131 = vmul.f32 %v1067, 0.7978846
      %v1132 = vmul.f32 %v1068, 0.7978846
      %v1133 = vmul.f32 %v1069, 0.7978846
      %v1134 = vmul.f32 %v1070, 0.7978846
      %v1135 = vmul.f32 %v1071, 0.7978846
      %v1136 = vmul.f32 %v1072, 0.7978846
      %v1137 = vmul.f32 %v1073, 0.7978846
      %v1138 = vmul.f32 %v1074, 0.7978846
      %v1139 = vmul.f32 %v1075, 0.7978846
      %v1140 = vmul.f32 %v1076, 0.7978846
      %v1141 = vmul.f32 %v1077, 0.7978846
      %v1142 = vmul.f32 %v1078, 0.7978846
      %v1143 = vmul.f32 %v1079, 0.7978846
      %v1144 = vmul.f32 %v1080, 0.7978846
      %v1145 = vmul.f32 %v1081, 0.7978846
      %v1146 = vmul.f32 %v1082, 0.7978846
      %v1147 = vmul.f32 %v1083, 0.7978846
      %v1148 = vmul.f32 %v1084, 0.7978846
      %v1149 = vmul.f32 %v1085, 0.7978846
      %v1150 = vmul.f32 %v1086, 0.7978846
      %v1151 = vmul.f32 %v1087, 0.7978846
      %v1152 = vmul.f32 %v1088, 0.7978846
      %v1153 = vmul.f32 %v1089, 0.7978846
      %v1154 = vmul.f32 %v1090, 0.7978846
      %v1155 = vmul.f32 %v1091, 0.7978846
      %v1156 = vmul.f32 %v1092, 0.7978846
      %v1157 = vmul.f32 %v1093, 0.7978846
      %v1158 = vmul.f32 %v1094, 0.7978846
      %v1159 = vmul.f32 %v1095, 0.7978846
      %v1160 = vmul.f32 %v1096, 0.7978846
      %v1161 = vmul.f32 %v1097, 0.7978846
      %v1162 = vmul.f32 %v1098, 0.7978846
      %v1163 = vmul.f32 %v1099, 0.7978846
      %v1164 = vtanh.pop %v1100
      %v1165 = vtanh.pop %v1101
      %v1166 = vtanh.pop %v1102
      %v1167 = vtanh.pop %v1103
      %v1168 = vtanh.pop %v1104
      %v1169 = vtanh.pop %v1105
      %v1170 = vtanh.pop %v1106
      %v1171 = vtanh.pop %v1107
      %v1172 = vtanh.pop %v1108
      %v1173 = vtanh.pop %v1109
      %v1174 = vtanh.pop %v1110
      %v1175 = vtanh.pop %v1111
      %v1176 = vtanh.pop %v1112
      %v1177 = vtanh.pop %v1113
      %v1178 = vtanh.pop %v1114
      %v1179 = vtanh.pop %v1115
      %v1180 = vtanh.pop %v1116
      %v1181 = vtanh.pop %v1117
      %v1182 = vtanh.pop %v1118
      %v1183 = vtanh.pop %v1119
      %v1184 = vtanh.pop %v1120
      %v1185 = vtanh.pop %v1121
      %v1186 = vtanh.pop %v1122
      %v1187 = vtanh.pop %v1123
      %v1188 = vtanh.pop %v1124
      %v1189 = vtanh.pop %v1125
      %v1190 = vtanh.pop %v1126
      %v1191 = vtanh.pop %v1127
      %v1192 = vtanh.pop %v1128
      %v1193 = vtanh.pop %v1129
      %v1194 = vtanh.pop %v1130
      %v1195 = vtanh.pop %v1131
      %v1196 = vtanh.pop %v1132
      %v1197 = vtanh.pop %v1133
      %v1198 = vtanh.pop %v1134
      %v1199 = vtanh.pop %v1135
      %v1200 = vtanh.pop %v1136
      %v1201 = vtanh.pop %v1137
      %v1202 = vtanh.pop %v1138
      %v1203 = vtanh.pop %v1139
      %v1204 = vtanh.pop %v1140
      %v1205 = vtanh.pop %v1141
      %v1206 = vtanh.pop %v1142
      %v1207 = vtanh.pop %v1143
      %v1208 = vtanh.pop %v1144
      %v1209 = vtanh.pop %v1145
      %v1210 = vtanh.pop %v1146
      %v1211 = vtanh.pop %v1147
      %v1212 = vtanh.pop %v1148
      %v1213 = vtanh.pop %v1149
      %v1214 = vtanh.pop %v1150
      %v1215 = vtanh.pop %v1151
      %v1216 = vtanh.pop %v1152
      %v1217 = vtanh.pop %v1153
      %v1218 = vtanh.pop %v1154
      %v1219 = vtanh.pop %v1155
      %v1220 = vtanh.pop %v1156
      %v1221 = vtanh.pop %v1157
      %v1222 = vtanh.pop %v1158
      %v1223 = vtanh.pop %v1159
      %v1224 = vtanh.pop %v1160
      %v1225 = vtanh.pop %v1161
      %v1226 = vtanh.pop %v1162
      %v1227 = vtanh.pop %v1163
      %v1228 = vadd.f32 %v1164, 1.0
      %v1229 = vadd.f32 %v1165, 1.0
      %v1230 = vadd.f32 %v1166, 1.0
      %v1231 = vadd.f32 %v1167, 1.0
      %v1232 = vadd.f32 %v1168, 1.0
      %v1233 = vadd.f32 %v1169, 1.0
      %v1234 = vadd.f32 %v1170, 1.0
      %v1235 = vadd.f32 %v1171, 1.0
      %v1236 = vadd.f32 %v1172, 1.0
      %v1237 = vadd.f32 %v1173, 1.0
      %v1238 = vadd.f32 %v1174, 1.0
      %v1239 = vadd.f32 %v1175, 1.0
      %v1240 = vadd.f32 %v1176, 1.0
      %v1241 = vadd.f32 %v1177, 1.0
      %v1242 = vadd.f32 %v1178, 1.0
      %v1243 = vadd.f32 %v1179, 1.0
      %v1244 = vadd.f32 %v1180, 1.0
      %v1245 = vadd.f32 %v1181, 1.0
      %v1246 = vadd.f32 %v1182, 1.0
      %v1247 = vadd.f32 %v1183, 1.0
      %v1248 = vadd.f32 %v1184, 1.0
      %v1249 = vadd.f32 %v1185, 1.0
      %v1250 = vadd.f32 %v1186, 1.0
      %v1251 = vadd.f32 %v1187, 1.0
      %v1252 = vadd.f32 %v1188, 1.0
      %v1253 = vadd.f32 %v1189, 1.0
      %v1254 = vadd.f32 %v1190, 1.0
      %v1255 = vadd.f32 %v1191, 1.0
      %v1256 = vadd.f32 %v1192, 1.0
      %v1257 = vadd.f32 %v1193, 1.0
      %v1258 = vadd.f32 %v1194, 1.0
      %v1259 = vadd.f32 %v1195, 1.0
      %v1260 = vadd.f32 %v1196, 1.0
      %v1261 = vadd.f32 %v1197, 1.0
      %v1262 = vadd.f32 %v1198, 1.0
      %v1263 = vadd.f32 %v1199, 1.0
      %v1264 = vadd.f32 %v1200, 1.0
      %v1265 = vadd.f32 %v1201, 1.0
      %v1266 = vadd.f32 %v1202, 1.0
      %v1267 = vadd.f32 %v1203, 1.0
      %v1268 = vadd.f32 %v1204, 1.0
      %v1269 = vadd.f32 %v1205, 1.0
      %v1270 = vadd.f32 %v1206, 1.0
      %v1271 = vadd.f32 %v1207, 1.0
      %v1272 = vadd.f32 %v1208, 1.0
      %v1273 = vadd.f32 %v1209, 1.0
      %v1274 = vadd.f32 %v1210, 1.0
      %v1275 = vadd.f32 %v1211, 1.0
      %v1276 = vadd.f32 %v1212, 1.0
      %v1277 = vadd.f32 %v1213, 1.0
      %v1278 = vadd.f32 %v1214, 1.0
      %v1279 = vadd.f32 %v1215, 1.0
      %v1280 = vadd.f32 %v1216, 1.0
      %v1281 = vadd.f32 %v1217, 1.0
      %v1282 = vadd.f32 %v1218, 1.0
      %v1283 = vadd.f32 %v1219, 1.0
      %v1284 = vadd.f32 %v1220, 1.0
      %v1285 = vadd.f32 %v1221, 1.0
      %v1286 = vadd.f32 %v1222, 1.0
      %v1287 = vadd.f32 %v1223, 1.0
      %v1288 = vadd.f32 %v1224, 1.0
      %v1289 = vadd.f32 %v1225, 1.0
      %v1290 = vadd.f32 %v1226, 1.0
      %v1291 = vadd.f32 %v1227, 1.0
      %v1292 = vmul.f32 %v1228, 0.5
      %v1293 = vmul.f32 %v1229, 0.5
      %v1294 = vmul.f32 %v1230, 0.5
      %v1295 = vmul.f32 %v1231, 0.5
      %v1296 = vmul.f32 %v1232, 0.5
      %v1297 = vmul.f32 %v1233, 0.5
      %v1298 = vmul.f32 %v1234, 0.5
      %v1299 = vmul.f32 %v1235, 0.5
      %v1300 = vmul.f32 %v1236, 0.5
      %v1301 = vmul.f32 %v1237, 0.5
      %v1302 = vmul.f32 %v1238, 0.5
      %v1303 = vmul.f32 %v1239, 0.5
      %v1304 = vmul.f32 %v1240, 0.5
      %v1305 = vmul.f32 %v1241, 0.5
      %v1306 = vmul.f32 %v1242, 0.5
      %v1307 = vmul.f32 %v1243, 0.5
      %v1308 = vmul.f32 %v1244, 0.5
      %v1309 = vmul.f32 %v1245, 0.5
      %v1310 = vmul.f32 %v1246, 0.5
      %v1311 = vmul.f32 %v1247, 0.5
      %v1312 = vmul.f32 %v1248, 0.5
      %v1313 = vmul.f32 %v1249, 0.5
      %v1314 = vmul.f32 %v1250, 0.5
      %v1315 = vmul.f32 %v1251, 0.5
      %v1316 = vmul.f32 %v1252, 0.5
      %v1317 = vmul.f32 %v1253, 0.5
      %v1318 = vmul.f32 %v1254, 0.5
      %v1319 = vmul.f32 %v1255, 0.5
      %v1320 = vmul.f32 %v1256, 0.5
      %v1321 = vmul.f32 %v1257, 0.5
      %v1322 = vmul.f32 %v1258, 0.5
      %v1323 = vmul.f32 %v1259, 0.5
      %v1324 = vmul.f32 %v1260, 0.5
      %v1325 = vmul.f32 %v1261, 0.5
      %v1326 = vmul.f32 %v1262, 0.5
      %v1327 = vmul.f32 %v1263, 0.5
      %v1328 = vmul.f32 %v1264, 0.5
      %v1329 = vmul.f32 %v1265, 0.5
      %v1330 = vmul.f32 %v1266, 0.5
      %v1331 = vmul.f32 %v1267, 0.5
      %v1332 = vmul.f32 %v1268, 0.5
      %v1333 = vmul.f32 %v1269, 0.5
      %v1334 = vmul.f32 %v1270, 0.5
      %v1335 = vmul.f32 %v1271, 0.5
      %v1336 = vmul.f32 %v1272, 0.5
      %v1337 = vmul.f32 %v1273, 0.5
      %v1338 = vmul.f32 %v1274, 0.5
      %v1339 = vmul.f32 %v1275, 0.5
      %v1340 = vmul.f32 %v1276, 0.5
      %v1341 = vmul.f32 %v1277, 0.5
      %v1342 = vmul.f32 %v1278, 0.5
      %v1343 = vmul.f32 %v1279, 0.5
      %v1344 = vmul.f32 %v1280, 0.5
      %v1345 = vmul.f32 %v1281, 0.5
      %v1346 = vmul.f32 %v1282, 0.5
      %v1347 = vmul.f32 %v1283, 0.5
      %v1348 = vmul.f32 %v1284, 0.5
      %v1349 = vmul.f32 %v1285, 0.5
      %v1350 = vmul.f32 %v1286, 0.5
      %v1351 = vmul.f32 %v1287, 0.5
      %v1352 = vmul.f32 %v1288, 0.5
      %v1353 = vmul.f32 %v1289, 0.5
      %v1354 = vmul.f32 %v1290, 0.5
      %v1355 = vmul.f32 %v1291, 0.5
      %v1356 = vmul.f32 %v590, %v1292
      %v1357 = vmul.f32 %v593, %v1293
      %v1358 = vmul.f32 %v598, %v1294
      %v1359 = vmul.f32 %v601, %v1295
      %v1360 = vmul.f32 %v606, %v1296
      %v1361 = vmul.f32 %v609, %v1297
      %v1362 = vmul.f32 %v614, %v1298
      %v1363 = vmul.f32 %v617, %v1299
      %v1364 = vmul.f32 %v622, %v1300
      %v1365 = vmul.f32 %v625, %v1301
      %v1366 = vmul.f32 %v630, %v1302
      %v1367 = vmul.f32 %v633, %v1303
      %v1368 = vmul.f32 %v638, %v1304
      %v1369 = vmul.f32 %v641, %v1305
      %v1370 = vmul.f32 %v646, %v1306
      %v1371 = vmul.f32 %v649, %v1307
      %v1372 = vmul.f32 %v654, %v1308
      %v1373 = vmul.f32 %v657, %v1309
      %v1374 = vmul.f32 %v662, %v1310
      %v1375 = vmul.f32 %v665, %v1311
      %v1376 = vmul.f32 %v670, %v1312
      %v1377 = vmul.f32 %v673, %v1313
      %v1378 = vmul.f32 %v678, %v1314
      %v1379 = vmul.f32 %v681, %v1315
      %v1380 = vmul.f32 %v686, %v1316
      %v1381 = vmul.f32 %v689, %v1317
      %v1382 = vmul.f32 %v694, %v1318
      %v1383 = vmul.f32 %v697, %v1319
      %v1384 = vmul.f32 %v702, %v1320
      %v1385 = vmul.f32 %v705, %v1321
      %v1386 = vmul.f32 %v710, %v1322
      %v1387 = vmul.f32 %v713, %v1323
      %v1388 = vmul.f32 %v718, %v1324
      %v1389 = vmul.f32 %v721, %v1325
      %v1390 = vmul.f32 %v726, %v1326
      %v1391 = vmul.f32 %v729, %v1327
      %v1392 = vmul.f32 %v734, %v1328
      %v1393 = vmul.f32 %v737, %v1329
      %v1394 = vmul.f32 %v742, %v1330
      %v1395 = vmul.f32 %v745, %v1331
      %v1396 = vmul.f32 %v750, %v1332
      %v1397 = vmul.f32 %v753, %v1333
      %v1398 = vmul.f32 %v758, %v1334
      %v1399 = vmul.f32 %v761, %v1335
      %v1400 = vmul.f32 %v766, %v1336
      %v1401 = vmul.f32 %v769, %v1337
      %v1402 = vmul.f32 %v774, %v1338
      %v1403 = vmul.f32 %v777, %v1339
      %v1404 = vmul.f32 %v782, %v1340
      %v1405 = vmul.f32 %v785, %v1341
      %v1406 = vmul.f32 %v790, %v1342
      %v1407 = vmul.f32 %v793, %v1343
      %v1408 = vmul.f32 %v798, %v1344
      %v1409 = vmul.f32 %v801, %v1345
      %v1410 = vmul.f32 %v806, %v1346
      %v1411 = vmul.f32 %v809, %v1347
      %v1412 = vmul.f32 %v814, %v1348
      %v1413 = vmul.f32 %v817, %v1349
      %v1414 = vmul.f32 %v822, %v1350
      %v1415 = vmul.f32 %v825, %v1351
      %v1416 = vmul.f32 %v830, %v1352
      %v1417 = vmul.f32 %v833, %v1353
      %v1418 = vmul.f32 %v838, %v1354
      %v1419 = vmul.f32 %v841, %v1355
      %v1420 = vld [vmem:[%s196] sm:$0xff]
      %v1421 = vadd.f32 %v1356, %v1357
      %v1422 = vadd.f32 %v1421, %v1358
      %v1423 = vadd.f32 %v1422, %v1359
      %v1424 = vadd.f32 %v1423, %v1360
      %v1425 = vadd.f32 %v1424, %v1361
      %v1426 = vadd.f32 %v1425, %v1362
      %v1427 = vadd.f32 %v1426, %v1363
      %v1428 = vadd.f32 %v1427, %v1364
      %v1429 = vadd.f32 %v1428, %v1365
      %v1430 = vadd.f32 %v1429, %v1366
      %v1431 = vadd.f32 %v1430, %v1367
      %v1432 = vadd.f32 %v1431, %v1368
      %v1433 = vadd.f32 %v1432, %v1369
      %v1434 = vadd.f32 %v1433, %v1370
      %v1435 = vadd.f32 %v1434, %v1371
      %v1436 = vadd.f32 %v1435, %v1372
      %v1437 = vadd.f32 %v1436, %v1373
      %v1438 = vadd.f32 %v1437, %v1374
      %v1439 = vadd.f32 %v1438, %v1375
      %v1440 = vadd.f32 %v1439, %v1376
      %v1441 = vadd.f32 %v1440, %v1377
      %v1442 = vadd.f32 %v1441, %v1378
      %v1443 = vadd.f32 %v1442, %v1379
      %v1444 = vadd.f32 %v1443, %v1380
      %v1445 = vadd.f32 %v1444, %v1381
      %v1446 = vadd.f32 %v1445, %v1382
      %v1447 = vadd.f32 %v1446, %v1383
      %v1448 = vadd.f32 %v1447, %v1384
      %v1449 = vadd.f32 %v1448, %v1385
      %v1450 = vadd.f32 %v1449, %v1386
      %v1451 = vadd.f32 %v1450, %v1387
      %v1452 = vadd.f32 %v1451, %v1388
      %v1453 = vadd.f32 %v1452, %v1389
      %v1454 = vadd.f32 %v1453, %v1390
      %v1455 = vadd.f32 %v1454, %v1391
      %v1456 = vadd.f32 %v1455, %v1392
      %v1457 = vadd.f32 %v1456, %v1393
      %v1458 = vadd.f32 %v1457, %v1394
      %v1459 = vadd.f32 %v1458, %v1395
      %v1460 = vadd.f32 %v1459, %v1396
      %v1461 = vadd.f32 %v1460, %v1397
      %v1462 = vadd.f32 %v1461, %v1398
      %v1463 = vadd.f32 %v1462, %v1399
      %v1464 = vadd.f32 %v1463, %v1400
      %v1465 = vadd.f32 %v1464, %v1401
      %v1466 = vadd.f32 %v1465, %v1402
      %v1467 = vadd.f32 %v1466, %v1403
      %v1468 = vadd.f32 %v1467, %v1404
      %v1469 = vadd.f32 %v1468, %v1405
      %v1470 = vadd.f32 %v1469, %v1406
      %v1471 = vadd.f32 %v1470, %v1407
      %v1472 = vadd.f32 %v1471, %v1408
      %v1473 = vadd.f32 %v1472, %v1409
      %v1474 = vadd.f32 %v1473, %v1410
      %v1475 = vadd.f32 %v1474, %v1411
      %v1476 = vadd.f32 %v1475, %v1412
      %v1477 = vadd.f32 %v1476, %v1413
      %v1478 = vadd.f32 %v1477, %v1414
      %v1479 = vadd.f32 %v1478, %v1415
      %v1480 = vadd.f32 %v1479, %v1416
      %v1481 = vadd.f32 %v1480, %v1417
      %v1482 = vadd.f32 %v1481, %v1418
      %v1483 = vadd.f32 %v1482, %v1419
      %v1484 = vadd.f32 %v1420, %v1483
      %1485 = vst [vmem:[%s196] sm:$0xff] %v1484
      %p1486 = scmp.lt.s32.totalorder %s18, 1
      %s1487 = scalar_select %p1486, %s18, 1
      %s1488 = smul.addr %s1487, 8
      %s1489 = scalar_lea.vmem %s3, %s1488
      // Predicated region
      $region37: #{_qalign_forward_jit.1} parent=31 // pred_check
        %p1490 = pneg %p116
      $region38: #{_qalign_forward_jit.1} parent=31 // pred_check_branch
        %1492 = sbr.rel (%p1490) target = $region40
      $region39: #{_qalign_forward_jit.1} parent=31 // pred_region
        _
      $region40: #{_qalign_forward_jit.1} parent=31 // pred_fallthru
        _
    $region32: #{_qalign_forward_jit.1} parent=5 // pred_fallthru
      _
    %p1493 = scmp.le.s32.totalorder 2, %s9
    // Predicated region
    $region41: #{_qalign_forward_jit.1} parent=5 // pred_check
      %p1494 = pneg %p1493
    $region42: #{_qalign_forward_jit.1} parent=5 // pred_check_branch
      %1496 = sbr.rel (%p1494) target = $region44
    $region43: #{_qalign_forward_jit.1} parent=5 // pred_region
      %s1497 = ssub.s32 %s9, 2
      // Predicated region
      $region45: #{_qalign_forward_jit.1} parent=43 // pred_check
        %p1498 = pneg %p122
      $region46: #{_qalign_forward_jit.1} parent=43 // pred_check_branch
        %1500 = sbr.rel (%p1498) target = $region48
      $region47: #{_qalign_forward_jit.1} parent=43 // pred_region
        %p1501 = scmp.lt.s32.totalorder %s20, 1
        %s1502 = scalar_select %p1501, %s20, 1
        %s1503 = smul.addr %s1502, 8
        %s1504 = scalar_lea.vmem %s3, %s1503
      $region48: #{_qalign_forward_jit.1} parent=43 // pred_fallthru
        _
    $region44: #{_qalign_forward_jit.1} parent=5 // pred_fallthru
      _
  $region6: #{_qalign_forward_jit.1} parent=0 // loop_footer
    %s13 = sadd.s32 1, %s9
  $region7: #{_qalign_forward_jit.1} parent=0 // loop_footer_branch
    %8 = sbr.rel target = $region3
  $region8: #{_qalign_forward_jit.1} parent=0 // loop_exit
    _

</llo_original>
